<compile_context>
chip_gen: v7x
topology: tpu7x:2x2x1
jax: 0.10.0
libtpu: 0.0.40
codegen_flags: <defaults>
</compile_context>

<pallas_src>
import jax
import jax.numpy as jnp
from jax.experimental import pallas as pl
from jax.experimental.pallas import tpu as pltpu

IN_FEATURES = 28 * 28    # 784
OUT_FEATURES = 10
DEFAULT_TM = 4096        # row tile; ~37 MiB padded/double-buffered VMEM at f32

_LANE = 128
_SUBLANE = 8


def _round_up(x, m):
    return ((x + m - 1) // m) * m


def _padded_block_bytes(shape, elem_bytes):
    """VMEM footprint of one buffer of a 2-D block after (8, 128) padding."""
    rows = _round_up(shape[0], _SUBLANE)
    cols = _round_up(shape[1], _LANE)
    return rows * cols * elem_bytes


def linear_kernel(x_ref, w_ref, b_ref, o_ref):
    # x_ref: (TM, 784)  w_ref: (784, 10)  b_ref: (1, 10) f32  o_ref: (TM, 10) f32
    acc = jnp.dot(x_ref[...], w_ref[...], preferred_element_type=jnp.float32)
    o_ref[...] = (acc + b_ref[...]).astype(o_ref.dtype)


def softmax_reg_forward(x, w_t, b, *, tm=DEFAULT_TM, stream_bf16=False):
    """x: (N, 1, 28, 28) or already-flat (N, 784); w_t: (784, 10); b: (10,)."""
    x2d = x.reshape(-1, IN_FEATURES)          # glue: torch-style .view(-1, 784)
    n = x2d.shape[0]
    b2d = b.reshape(1, OUT_FEATURES).astype(jnp.float32)

    if stream_bf16:
        # Halve streamed bytes on the HBM-read-bound x (and weight); MXU takes
        # bf16 natively, accumulation stays f32, output stays f32.
        x2d = x2d.astype(jnp.bfloat16)
        w_t = w_t.astype(jnp.bfloat16)
    in_bytes = jnp.dtype(x2d.dtype).itemsize

    # Row tile: multiple of 8 (sublane rule).  Cap at round_up(cdiv(n, 2), 8)
    # so a medium N still splits into >= 2 balanced grid steps (keeps both v7x
    # TensorCores busy); also never exceed the (padded) batch itself.
    tm = min(tm, max(_SUBLANE, _round_up(pl.cdiv(n, 2), _SUBLANE)))
    tm = min(tm, _round_up(n, _SUBLANE))
    grid = (pl.cdiv(n, tm),)

    # VMEM budget with padded tile shapes (x block occupies TM x 896 lanes,
    # out block TM x 128 lanes), 2 pipeline buffers per operand, + headroom.
    vmem_bytes = (
        2 * _padded_block_bytes((tm, IN_FEATURES), in_bytes)              # x
        + 2 * _padded_block_bytes((tm, OUT_FEATURES), 4)                  # out
        + 2 * _padded_block_bytes((IN_FEATURES, OUT_FEATURES), in_bytes)  # w_t
        + 2 * _padded_block_bytes((1, OUT_FEATURES), 4)                   # bias
    )
    vmem_limit = vmem_bytes + (4 << 20)

    cost = pl.CostEstimate(
        flops=2 * n * IN_FEATURES * OUT_FEATURES,
        transcendentals=0,
        bytes_accessed=(n * IN_FEATURES * in_bytes
                        + IN_FEATURES * OUT_FEATURES * in_bytes
                        + (n * OUT_FEATURES + OUT_FEATURES) * 4),
    )

    return pl.pallas_call(
        linear_kernel,
        out_shape=jax.ShapeDtypeStruct((n, OUT_FEATURES), jnp.float32),
        grid=grid,
        in_specs=[
            # x: streamed tile per grid step (double-buffered by Pallas).
            pl.BlockSpec((tm, IN_FEATURES), lambda i: (i, 0)),
            # weight / bias: resident across all grid steps.
            pl.BlockSpec((IN_FEATURES, OUT_FEATURES), lambda i: (0, 0)),
            pl.BlockSpec((1, OUT_FEATURES), lambda i: (0, 0)),
        ],
        # Keep the narrow (TM, 10) output block: padding it to 128 lanes would
        # add ~12x write traffic to a bandwidth-bound kernel.
        out_specs=pl.BlockSpec((tm, OUT_FEATURES), lambda i: (i, 0)),
        compiler_params=pltpu.CompilerParams(
            # Independent batch tiles -> shard across v7x's 2 TensorCores;
            # neutral on single-core v5e/v6e.
            dimension_semantics=("parallel",),
            vmem_limit_bytes=vmem_limit,
        ),
        cost_estimate=cost,
    )(x2d, w_t, b2d)


if __name__ == "__main__":
    key = jax.random.PRNGKey(0)
    k_x, k_w, k_b = jax.random.split(key, 3)

    # Small batch of MNIST-shaped inputs (N, C=1, H=28, W=28), like the torch module expects.
    batch = 8
    x = jax.random.normal(k_x, (batch, 1, 28, 28), dtype=jnp.float32)

    # Deterministic parameter init matching nn.Linear's uniform(-1/sqrt(fan_in), 1/sqrt(fan_in)).
    bound = 1.0 / (IN_FEATURES ** 0.5)
    w = jax.random.uniform(k_w, (OUT_FEATURES, IN_FEATURES),
                           minval=-bound, maxval=bound, dtype=jnp.float32)
    b = jax.random.uniform(k_b, (OUT_FEATURES,),
                           minval=-bound, maxval=bound, dtype=jnp.float32)
    # Pre-transpose once (hoisted out of the per-call path), stored as (784, 10).
    w_t = jnp.asarray(w.T)

    out = jax.block_until_ready(softmax_reg_forward(x, w_t, b))
    ref = x.reshape(-1, IN_FEATURES) @ w_t + b[None, :]
    assert out.shape == (batch, OUT_FEATURES)
    assert jnp.allclose(out, ref, atol=1e-4, rtol=1e-4)

    # Multi-tile grid with a non-divisible N: validates the megacore-friendly
    # 2-step split and the padded tail block.
    n_big = 2500
    x_big = jax.random.normal(k_x, (n_big, IN_FEATURES), dtype=jnp.float32)
    out_big = jax.block_until_ready(softmax_reg_forward(x_big, w_t, b))
    ref_big = x_big @ w_t + b[None, :]
    assert out_big.shape == (n_big, OUT_FEATURES)
    assert jnp.allclose(out_big, ref_big, atol=1e-3, rtol=1e-4)

    # Optional bf16-streaming path (~2x less HBM read traffic); looser tolerance.
    out_bf16 = jax.block_until_ready(
        softmax_reg_forward(x_big, w_t, b, stream_bf16=True))
    assert out_bf16.shape == (n_big, OUT_FEATURES)
    assert jnp.allclose(out_bf16, ref_big, atol=7.5e-2, rtol=0)

    print("KERNEL_OK")
</pallas_src>

<mosaic_0001>
module attributes {stable_mosaic.version = 11 : i64} {
  func.func @linear_kernel(%arg0: i32, %arg1: memref<8x784xf32, #tpu.memory_space<vmem>>, %arg2: memref<784x10xf32, #tpu.memory_space<vmem>>, %arg3: memref<1x10xf32, #tpu.memory_space<vmem>>, %arg4: memref<8x10xf32, #tpu.memory_space<vmem>>) attributes {dimension_semantics = [#tpu.dimension_semantics<parallel>], iteration_bounds = array<i64: 1>, scalar_prefetch = 0 : i64, scratch_operands = 0 : i64, tpu.core_type = #tpu.core_type<tc>, window_params = [{transform_indices = @transform_0, window_bounds = array<i64: 8, 784>}, {pipeline_mode = #tpu.pipeline_mode<synchronous>, transform_indices = @transform_1, window_bounds = array<i64: 784, 10>}, {pipeline_mode = #tpu.pipeline_mode<synchronous>, transform_indices = @transform_2, window_bounds = array<i64: 1, 10>}, {transform_indices = @transform_3, window_bounds = array<i64: 8, 10>}]} {
    %c0 = arith.constant 0 : index
    %c0_0 = arith.constant 0 : index
    %0 = vector.load %arg1[%c0, %c0_0] : memref<8x784xf32, #tpu.memory_space<vmem>>, vector<8x784xf32>
    %c0_1 = arith.constant 0 : index
    %c0_2 = arith.constant 0 : index
    %1 = vector.load %arg2[%c0_1, %c0_2] : memref<784x10xf32, #tpu.memory_space<vmem>>, vector<784x10xf32>
    %cst = arith.constant dense<0.000000e+00> : vector<8x10xf32>
    %2 = tpu.matmul %0, %1, %cst {dimension_numbers = #tpu.dot_dimension_numbers<[1], [0], [0], [1], [0, 0, 1, 1], [], []>} : vector<8x784xf32>, vector<784x10xf32>, vector<8x10xf32> -> vector<8x10xf32>
    %c0_3 = arith.constant 0 : index
    %c0_4 = arith.constant 0 : index
    %3 = vector.load %arg3[%c0_3, %c0_4] : memref<1x10xf32, #tpu.memory_space<vmem>>, vector<1x10xf32>
    %4 = vector.broadcast %3 : vector<1x10xf32> to vector<8x10xf32>
    %5 = arith.addf %2, %4 : vector<8x10xf32>
    %c0_5 = arith.constant 0 : index
    %c0_6 = arith.constant 0 : index
    %6 = vector.load %arg4[%c0_5, %c0_6] : memref<8x10xf32, #tpu.memory_space<vmem>>, vector<8x10xf32>
    tpu.vector_store %arg4[%c0_5, %c0_6], %5 {strides = array<i32>} : memref<8x10xf32, #tpu.memory_space<vmem>>, vector<8x10xf32>,
    return
  }
  func.func @transform_0(%arg0: i32) -> (i32, i32) {
    %c0_i32 = arith.constant 0 : i32
    %c0_i32_0 = arith.constant 0 : i32
    return %arg0, %c0_i32 : i32, i32
  }
  func.func @transform_1(%arg0: i32) -> (i32, i32) {
    %c0_i32 = arith.constant 0 : i32
    %c0_i32_0 = arith.constant 0 : i32
    %c0_i32_1 = arith.constant 0 : i32
    return %c0_i32, %c0_i32_0 : i32, i32
  }
  func.func @transform_2(%arg0: i32) -> (i32, i32) {
    %c0_i32 = arith.constant 0 : i32
    %c0_i32_0 = arith.constant 0 : i32
    %c0_i32_1 = arith.constant 0 : i32
    return %c0_i32, %c0_i32_0 : i32, i32
  }
  func.func @transform_3(%arg0: i32) -> (i32, i32) {
    %c0_i32 = arith.constant 0 : i32
    %c0_i32_0 = arith.constant 0 : i32
    return %arg0, %c0_i32 : i32, i32
  }
}

</mosaic_0001>

<llo_original>
// kernel: tpu_custom_call.1
$region0: #{tpu_custom_call.1}
  #allocation0 [shape = 'u32[]', space=smem, size = 0x4, offset = 0x4, fixed_abs, tag = 'smem constant byte address 0x4 - core index']
  #allocation1 [shape = 'u32[144,128]{1,0:T(1,128)}', space=vmem, size = 0x12000, scoped, tag = 'internal scratch']
  %s0 = inlined_call_operand.vmem [shape: f32[8,784], index: 0, kind: input, shape index: {}]
  %s1 = inlined_call_operand.vmem [shape: f32[784,10], index: 1, kind: input, shape index: {}]
  %s2 = inlined_call_operand.vmem [shape: f32[1,10], index: 2, kind: input, shape index: {}]
  %s3 = inlined_call_operand.hbm [shape: f32[8,10], index: 3, kind: output, shape index: {}]
  %s4 = sld [smem:[#allocation0]]
  $region22: #{tpu_custom_call.1} parent=0
    _
  %s6 = ssub.s32 1, %s4
  %s7 = scalar_select 0, %s6, %s4
  $region1: #{tpu_custom_call.1} parent=0
    #allocation2 [shape = 'u8[4096]{0}', space=vmem, size = 0x1000, scoped, tag = 'output window, operand 0, single buffered']
    #allocation3 [shape = 's32[1]{0}', space=sflag, size = 0x4, scoped, tag = 'scoped memory for tpu_custom_call.1']
    %8 = vsyncpa [#allocation3], 0
    // Predicated region
    $region2: #{tpu_custom_call.1} parent=1 // pred_check
      _
    $region3: #{tpu_custom_call.1} parent=1 // pred_check_branch
      %10 = sbr.rel (0) target = $region5
    $region4: #{tpu_custom_call.1} parent=1 // pred_region
      _
    $region5: #{tpu_custom_call.1} parent=1 // pred_fallthru
      _
    // Predicated region
    $region6: #{tpu_custom_call.1} parent=1 // pred_check
      _
    $region7: #{tpu_custom_call.1} parent=1 // pred_check_branch
      %12 = sbr.rel (0) target = $region9
    $region8: #{tpu_custom_call.1} parent=1 // pred_region
      _
    $region9: #{tpu_custom_call.1} parent=1 // pred_fallthru
      _
    // Predicated region
    $region10: #{tpu_custom_call.1} parent=1 // pred_check
      _
    $region11: #{tpu_custom_call.1} parent=1 // pred_check_branch
      %14 = sbr.rel (0) target = $region13
    $region12: #{tpu_custom_call.1} parent=1 // pred_region
      _
    $region13: #{tpu_custom_call.1} parent=1 // pred_fallthru
      _
    %v15 = vld [vmem:[%s0] sm:$0xff]
    %v16 = vld [vmem:[%s0 + $0x8] sm:$0xff]
    %v17 = vld [vmem:[%s0 + $0x10] sm:$0xff]
    %v18 = vld [vmem:[%s0 + $0x18] sm:$0xff]
    %v19 = vld [vmem:[%s0 + $0x20] sm:$0xff]
    %v20 = vld [vmem:[%s0 + $0x28] sm:$0xff]
    %v21 = vld [vmem:[%s0 + $0x30] sm:$0xff]
    %v22 = vld [vmem:[%s1] sm:$0xff]
    %v23 = vld [vmem:[%s1 + $0x8] sm:$0xff]
    %v24 = vld [vmem:[%s1 + $0x10] sm:$0xff]
    %v25 = vld [vmem:[%s1 + $0x18] sm:$0xff]
    %v26 = vld [vmem:[%s1 + $0x20] sm:$0xff]
    %v27 = vld [vmem:[%s1 + $0x28] sm:$0xff]
    %v28 = vld [vmem:[%s1 + $0x30] sm:$0xff]
    %v29 = vld [vmem:[%s1 + $0x38] sm:$0xff]
    %v30 = vld [vmem:[%s1 + $0x40] sm:$0xff]
    %v31 = vld [vmem:[%s1 + $0x48] sm:$0xff]
    %v32 = vld [vmem:[%s1 + $0x50] sm:$0xff]
    %v33 = vld [vmem:[%s1 + $0x58] sm:$0xff]
    %v34 = vld [vmem:[%s1 + $0x60] sm:$0xff]
    %v35 = vld [vmem:[%s1 + $0x68] sm:$0xff]
    %v36 = vld [vmem:[%s1 + $0x70] sm:$0xff]
    %v37 = vld [vmem:[%s1 + $0x78] sm:$0xff]
    %v38 = vld [vmem:[%s1 + $0x80] sm:$0xff]
    %v39 = vld [vmem:[%s1 + $0x88] sm:$0xff]
    %v40 = vld [vmem:[%s1 + $0x90] sm:$0xff]
    %v41 = vld [vmem:[%s1 + $0x98] sm:$0xff]
    %v42 = vld [vmem:[%s1 + $0xa0] sm:$0xff]
    %v43 = vld [vmem:[%s1 + $0xa8] sm:$0xff]
    %v44 = vld [vmem:[%s1 + $0xb0] sm:$0xff]
    %v45 = vld [vmem:[%s1 + $0xb8] sm:$0xff]
    %v46 = vld [vmem:[%s1 + $0xc0] sm:$0xff]
    %v47 = vld [vmem:[%s1 + $0xc8] sm:$0xff]
    %v48 = vld [vmem:[%s1 + $0xd0] sm:$0xff]
    %v49 = vld [vmem:[%s1 + $0xd8] sm:$0xff]
    %v50 = vld [vmem:[%s1 + $0xe0] sm:$0xff]
    %v51 = vld [vmem:[%s1 + $0xe8] sm:$0xff]
    %v52 = vld [vmem:[%s1 + $0xf0] sm:$0xff]
    %v53 = vld [vmem:[%s1 + $0xf8] sm:$0xff]
    %v54 = vld [vmem:[%s1 + $0x100] sm:$0xff]
    %v55 = vld [vmem:[%s1 + $0x108] sm:$0xff]
    %v56 = vld [vmem:[%s1 + $0x110] sm:$0xff]
    %v57 = vld [vmem:[%s1 + $0x118] sm:$0xff]
    %v58 = vld [vmem:[%s1 + $0x120] sm:$0xff]
    %v59 = vld [vmem:[%s1 + $0x128] sm:$0xff]
    %v60 = vld [vmem:[%s1 + $0x130] sm:$0xff]
    %v61 = vld [vmem:[%s1 + $0x138] sm:$0xff]
    %v62 = vld [vmem:[%s1 + $0x140] sm:$0xff]
    %v63 = vld [vmem:[%s1 + $0x148] sm:$0xff]
    %v64 = vld [vmem:[%s1 + $0x150] sm:$0xff]
    %v65 = vld [vmem:[%s1 + $0x158] sm:$0xff]
    %v66 = vld [vmem:[%s1 + $0x160] sm:$0xff]
    %v67 = vld [vmem:[%s1 + $0x168] sm:$0xff]
    %v68 = vld [vmem:[%s1 + $0x170] sm:$0xff]
    %v69 = vld [vmem:[%s1 + $0x178] sm:$0xff]
    %v70 = vld [vmem:[%s1 + $0x180] sm:$0xff]
    %v71 = vld [vmem:[%s1 + $0x188] sm:$0xff]
    %v72 = vld [vmem:[%s1 + $0x190] sm:$0xff]
    %v73 = vld [vmem:[%s1 + $0x198] sm:$0xff]
    %v74 = vld [vmem:[%s1 + $0x1a0] sm:$0xff]
    %v75 = vld [vmem:[%s1 + $0x1a8] sm:$0xff]
    %v76 = vld [vmem:[%s1 + $0x1b0] sm:$0xff]
    %v77 = vld [vmem:[%s1 + $0x1b8] sm:$0xff]
    %v78 = vld [vmem:[%s1 + $0x1c0] sm:$0xff]
    %v79 = vld [vmem:[%s1 + $0x1c8] sm:$0xff]
    %v80 = vld [vmem:[%s1 + $0x1d0] sm:$0xff]
    %v81 = vld [vmem:[%s1 + $0x1d8] sm:$0xff]
    %v82 = vld [vmem:[%s1 + $0x1e0] sm:$0xff]
    %v83 = vld [vmem:[%s1 + $0x1e8] sm:$0xff]
    %v84 = vld [vmem:[%s1 + $0x1f0] sm:$0xff]
    %v85 = vld [vmem:[%s1 + $0x1f8] sm:$0xff]
    %v86 = vld [vmem:[%s1 + $0x200] sm:$0xff]
    %v87 = vld [vmem:[%s1 + $0x208] sm:$0xff]
    %v88 = vld [vmem:[%s1 + $0x210] sm:$0xff]
    %v89 = vld [vmem:[%s1 + $0x218] sm:$0xff]
    %v90 = vld [vmem:[%s1 + $0x220] sm:$0xff]
    %v91 = vld [vmem:[%s1 + $0x228] sm:$0xff]
    %v92 = vld [vmem:[%s1 + $0x230] sm:$0xff]
    %v93 = vld [vmem:[%s1 + $0x238] sm:$0xff]
    %v94 = vld [vmem:[%s1 + $0x240] sm:$0xff]
    %v95 = vld [vmem:[%s1 + $0x248] sm:$0xff]
    %v96 = vld [vmem:[%s1 + $0x250] sm:$0xff]
    %v97 = vld [vmem:[%s1 + $0x258] sm:$0xff]
    %v98 = vld [vmem:[%s1 + $0x260] sm:$0xff]
    %v99 = vld [vmem:[%s1 + $0x268] sm:$0xff]
    %v100 = vld [vmem:[%s1 + $0x270] sm:$0xff]
    %v101 = vld [vmem:[%s1 + $0x278] sm:$0xff]
    %v102 = vld [vmem:[%s1 + $0x280] sm:$0xff]
    %v103 = vld [vmem:[%s1 + $0x288] sm:$0xff]
    %v104 = vld [vmem:[%s1 + $0x290] sm:$0xff]
    %v105 = vld [vmem:[%s1 + $0x298] sm:$0xff]
    %v106 = vld [vmem:[%s1 + $0x2a0] sm:$0xff]
    %v107 = vld [vmem:[%s1 + $0x2a8] sm:$0xff]
    %v108 = vld [vmem:[%s1 + $0x2b0] sm:$0xff]
    %v109 = vld [vmem:[%s1 + $0x2b8] sm:$0xff]
    %v110 = vld [vmem:[%s1 + $0x2c0] sm:$0xff]
    %v111 = vld [vmem:[%s1 + $0x2c8] sm:$0xff]
    %v112 = vld [vmem:[%s1 + $0x2d0] sm:$0xff]
    %v113 = vld [vmem:[%s1 + $0x2d8] sm:$0xff]
    %v114 = vld [vmem:[%s1 + $0x2e0] sm:$0xff]
    %v115 = vld [vmem:[%s1 + $0x2e8] sm:$0xff]
    %v116 = vld [vmem:[%s1 + $0x2f0] sm:$0xff]
    %v117 = vld [vmem:[%s1 + $0x2f8] sm:$0xff]
    %v118 = vld [vmem:[%s1 + $0x300] sm:$0xff]
    %v119 = vld [vmem:[%s1 + $0x308] sm:$0xff]
    %v120 = vld [vmem:[%s2] sm:$0x1]
    %v122 = vlaneseq
    %v123 = vshrl.u32 %v122, 7
    %v124 = vsub.s32 0, %v123
    %v125 = vrot.slane %v120, %v124
    %vm127 = vcmask 130048
    %v129 = vsel %vm127, %v21, 0
    %131 = vmatprep.subr.mxu0 0.0
    %132 = vmatpush1.msra.mxu0 %v22
    %133 = vmatprep.subr.mxu0 0.0
    %134 = vmatpush1.msra.mxu0 %v23
    %135 = vmatprep.subr.mxu0 0.0
    %136 = vmatpush1.msra.mxu0 %v24
    %137 = vmatprep.subr.mxu0 0.0
    %138 = vmatpush1.msra.mxu0 %v25
    %139 = vmatprep.subr.mxu0 0.0
    %140 = vmatpush1.msra.mxu0 %v26
    %141 = vmatprep.subr.mxu0 0.0
    %142 = vmatpush1.msra.mxu0 %v27
    %143 = vmatprep.subr.mxu0 0.0
    %144 = vmatpush1.msra.mxu0 %v28
    %145 = vmatprep.subr.mxu0 0.0
    %146 = vmatpush1.msra.mxu0 %v29
    %147 = vmatprep.subr.mxu0 0.0
    %148 = vmatpush1.msra.mxu0 %v30
    %149 = vmatprep.subr.mxu0 0.0
    %150 = vmatpush1.msra.mxu0 %v31
    %151 = vmatprep.subr.mxu0 0.0
    %152 = vmatpush1.msra.mxu0 %v32
    %153 = vmatprep.subr.mxu0 0.0
    %154 = vmatpush1.msra.mxu0 %v33
    %155 = vmatprep.subr.mxu0 0.0
    %156 = vmatpush1.msra.mxu0 %v34
    %157 = vmatprep.subr.mxu0 0.0
    %158 = vmatpush1.msra.mxu0 %v35
    %159 = vmatprep.subr.mxu0 0.0
    %160 = vmatpush1.msra.mxu0 %v36
    %161 = vmatprep.subr.mxu0 0.0
    %162 = vmatpush1.msra.mxu0 %v37
    %163 = vmatprep.subr.mxu0 0.0
    %164 = vmatpush1.msra.mxu0 %v38
    %165 = vmatprep.subr.mxu0 0.0
    %166 = vmatpush1.msra.mxu0 %v39
    %167 = vmatprep.subr.mxu0 0.0
    %168 = vmatpush1.msra.mxu0 %v40
    %169 = vmatprep.subr.mxu0 0.0
    %170 = vmatpush1.msra.mxu0 %v41
    %171 = vmatprep.subr.mxu0 0.0
    %172 = vmatpush1.msra.mxu0 %v42
    %173 = vmatprep.subr.mxu0 0.0
    %174 = vmatpush1.msra.mxu0 %v43
    %175 = vmatprep.subr.mxu0 0.0
    %176 = vmatpush1.msra.mxu0 %v44
    %177 = vmatprep.subr.mxu0 0.0
    %178 = vmatpush1.msra.mxu0 %v45
    %179 = vmatprep.subr.mxu0 0.0
    %180 = vmatpush1.msra.mxu0 %v46
    %181 = vmatprep.subr.mxu0 0.0
    %182 = vmatpush1.msra.mxu0 %v47
    %183 = vmatprep.subr.mxu0 0.0
    %184 = vmatpush1.msra.mxu0 %v48
    %185 = vmatprep.subr.mxu0 0.0
    %186 = vmatpush1.msra.mxu0 %v49
    %187 = vmatprep.subr.mxu0 0.0
    %188 = vmatpush1.msra.mxu0 %v50
    %189 = vmatprep.subr.mxu0 0.0
    %190 = vmatpush1.msra.mxu0 %v51
    %191 = vmatprep.subr.mxu0 0.0
    %192 = vmatpush1.msra.mxu0 %v52
    %193 = vmatprep.subr.mxu0 0.0
    %194 = vmatpush1.msra.mxu0 %v53
    %195 = vmatprep.mubr.f32.mxu0 %v16
    %196 = vmatmul.mubr.f32.gmra.mrb[0].mxu0 %v15
    %v197 = vpop.f32.mrb[0].mxu0
    %v198 = vadd.f32 %v125, %v197
    %v199 = vpop.f32.mrb[0].mxu0
    %200 = vdwg.mxu0
    %201 = vmatprep.subr.mxu0 0.0
    %202 = vmatpush1.msra.mxu0 %v54
    %203 = vmatprep.subr.mxu0 0.0
    %204 = vmatpush1.msra.mxu0 %v55
    %205 = vmatprep.subr.mxu0 0.0
    %206 = vmatpush1.msra.mxu0 %v56
    %207 = vmatprep.subr.mxu0 0.0
    %208 = vmatpush1.msra.mxu0 %v57
    %209 = vmatprep.subr.mxu0 0.0
    %210 = vmatpush1.msra.mxu0 %v58
    %211 = vmatprep.subr.mxu0 0.0
    %212 = vmatpush1.msra.mxu0 %v59
    %213 = vmatprep.subr.mxu0 0.0
    %214 = vmatpush1.msra.mxu0 %v60
    %215 = vmatprep.subr.mxu0 0.0
    %216 = vmatpush1.msra.mxu0 %v61
    %217 = vmatprep.subr.mxu0 0.0
    %218 = vmatpush1.msra.mxu0 %v62
    %219 = vmatprep.subr.mxu0 0.0
    %220 = vmatpush1.msra.mxu0 %v63
    %221 = vmatprep.subr.mxu0 0.0
    %222 = vmatpush1.msra.mxu0 %v64
    %223 = vmatprep.subr.mxu0 0.0
    %224 = vmatpush1.msra.mxu0 %v65
    %225 = vmatprep.subr.mxu0 0.0
    %226 = vmatpush1.msra.mxu0 %v66
    %227 = vmatprep.subr.mxu0 0.0
    %228 = vmatpush1.msra.mxu0 %v67
    %229 = vmatprep.subr.mxu0 0.0
    %230 = vmatpush1.msra.mxu0 %v68
    %231 = vmatprep.subr.mxu0 0.0
    %232 = vmatpush1.msra.mxu0 %v69
    %233 = vmatprep.subr.mxu0 0.0
    %234 = vmatpush1.msra.mxu0 %v70
    %235 = vmatprep.subr.mxu0 0.0
    %236 = vmatpush1.msra.mxu0 %v71
    %237 = vmatprep.subr.mxu0 0.0
    %238 = vmatpush1.msra.mxu0 %v72
    %239 = vmatprep.subr.mxu0 0.0
    %240 = vmatpush1.msra.mxu0 %v73
    %241 = vmatprep.subr.mxu0 0.0
    %242 = vmatpush1.msra.mxu0 %v74
    %243 = vmatprep.subr.mxu0 0.0
    %244 = vmatpush1.msra.mxu0 %v75
    %245 = vmatprep.subr.mxu0 0.0
    %246 = vmatpush1.msra.mxu0 %v76
    %247 = vmatprep.subr.mxu0 0.0
    %248 = vmatpush1.msra.mxu0 %v77
    %249 = vmatprep.subr.mxu0 0.0
    %250 = vmatpush1.msra.mxu0 %v78
    %251 = vmatprep.subr.mxu0 0.0
    %252 = vmatpush1.msra.mxu0 %v79
    %253 = vmatprep.subr.mxu0 0.0
    %254 = vmatpush1.msra.mxu0 %v80
    %255 = vmatprep.subr.mxu0 0.0
    %256 = vmatpush1.msra.mxu0 %v81
    %257 = vmatprep.subr.mxu0 0.0
    %258 = vmatpush1.msra.mxu0 %v82
    %259 = vmatprep.subr.mxu0 0.0
    %260 = vmatpush1.msra.mxu0 %v83
    %261 = vmatprep.subr.mxu0 0.0
    %262 = vmatpush1.msra.mxu0 %v84
    %263 = vmatprep.subr.mxu0 0.0
    %264 = vmatpush1.msra.mxu0 %v85
    %265 = vmatprep.mubr.f32.mxu0 %v18
    %266 = vmatmul.mubr.f32.gmra.mrb[0].mxu0 %v17
    %v267 = vpop.f32.mrb[0].mxu0
    %v268 = vadd.f32 %v198, %v267
    %v269 = vpop.f32.mrb[0].mxu0
    %270 = vdwg.mxu0
    %271 = vmatprep.subr.mxu0 0.0
    %272 = vmatpush1.msra.mxu0 %v86
    %273 = vmatprep.subr.mxu0 0.0
    %274 = vmatpush1.msra.mxu0 %v87
    %275 = vmatprep.subr.mxu0 0.0
    %276 = vmatpush1.msra.mxu0 %v88
    %277 = vmatprep.subr.mxu0 0.0
    %278 = vmatpush1.msra.mxu0 %v89
    %279 = vmatprep.subr.mxu0 0.0
    %280 = vmatpush1.msra.mxu0 %v90
    %281 = vmatprep.subr.mxu0 0.0
    %282 = vmatpush1.msra.mxu0 %v91
    %283 = vmatprep.subr.mxu0 0.0
    %284 = vmatpush1.msra.mxu0 %v92
    %285 = vmatprep.subr.mxu0 0.0
    %286 = vmatpush1.msra.mxu0 %v93
    %287 = vmatprep.subr.mxu0 0.0
    %288 = vmatpush1.msra.mxu0 %v94
    %289 = vmatprep.subr.mxu0 0.0
    %290 = vmatpush1.msra.mxu0 %v95
    %291 = vmatprep.subr.mxu0 0.0
    %292 = vmatpush1.msra.mxu0 %v96
    %293 = vmatprep.subr.mxu0 0.0
    %294 = vmatpush1.msra.mxu0 %v97
    %295 = vmatprep.subr.mxu0 0.0
    %296 = vmatpush1.msra.mxu0 %v98
    %297 = vmatprep.subr.mxu0 0.0
    %298 = vmatpush1.msra.mxu0 %v99
    %299 = vmatprep.subr.mxu0 0.0
    %300 = vmatpush1.msra.mxu0 %v100
    %301 = vmatprep.subr.mxu0 0.0
    %302 = vmatpush1.msra.mxu0 %v101
    %303 = vmatprep.subr.mxu0 0.0
    %304 = vmatpush1.msra.mxu0 %v102
    %305 = vmatprep.subr.mxu0 0.0
    %306 = vmatpush1.msra.mxu0 %v103
    %307 = vmatprep.subr.mxu0 0.0
    %308 = vmatpush1.msra.mxu0 %v104
    %309 = vmatprep.subr.mxu0 0.0
    %310 = vmatpush1.msra.mxu0 %v105
    %311 = vmatprep.subr.mxu0 0.0
    %312 = vmatpush1.msra.mxu0 %v106
    %313 = vmatprep.subr.mxu0 0.0
    %314 = vmatpush1.msra.mxu0 %v107
    %315 = vmatprep.subr.mxu0 0.0
    %316 = vmatpush1.msra.mxu0 %v108
    %317 = vmatprep.subr.mxu0 0.0
    %318 = vmatpush1.msra.mxu0 %v109
    %319 = vmatprep.subr.mxu0 0.0
    %320 = vmatpush1.msra.mxu0 %v110
    %321 = vmatprep.subr.mxu0 0.0
    %322 = vmatpush1.msra.mxu0 %v111
    %323 = vmatprep.subr.mxu0 0.0
    %324 = vmatpush1.msra.mxu0 %v112
    %325 = vmatprep.subr.mxu0 0.0
    %326 = vmatpush1.msra.mxu0 %v113
    %327 = vmatprep.subr.mxu0 0.0
    %328 = vmatpush1.msra.mxu0 %v114
    %329 = vmatprep.subr.mxu0 0.0
    %330 = vmatpush1.msra.mxu0 %v115
    %331 = vmatprep.subr.mxu0 0.0
    %332 = vmatpush1.msra.mxu0 %v116
    %333 = vmatprep.subr.mxu0 0.0
    %334 = vmatpush1.msra.mxu0 %v117
    %335 = vmatprep.mubr.f32.mxu0 %v20
    %336 = vmatmul.mubr.f32.gmra.mrb[0].mxu0 %v19
    %v337 = vpop.f32.mrb[0].mxu0
    %v338 = vadd.f32 %v268, %v337
    %v339 = vpop.f32.mrb[0].mxu0
    %340 = vdwg.mxu0
    %341 = vmatprep.subr.mxu0 0.0
    %342 = vmatpush1.msra.mxu0 %v118
    %343 = vmatprep.subr.mxu0 0.0
    %344 = vmatpush1.msra.mxu0 %v119
    %345 = vmatprep.subr.mxu0 0.0
    %346 = vmatpush1.msra.mxu0 0.0
    %347 = vmatprep.subr.mxu0 0.0
    %348 = vmatpush1.msra.mxu0 0.0
    %349 = vmatprep.subr.mxu0 0.0
    %350 = vmatpush1.msra.mxu0 0.0
    %351 = vmatprep.subr.mxu0 0.0
    %352 = vmatpush1.msra.mxu0 0.0
    %353 = vmatprep.subr.mxu0 0.0
    %354 = vmatpush1.msra.mxu0 0.0
    %355 = vmatprep.subr.mxu0 0.0
    %356 = vmatpush1.msra.mxu0 0.0
    %357 = vmatprep.subr.mxu0 0.0
    %358 = vmatpush1.msra.mxu0 0.0
    %359 = vmatprep.subr.mxu0 0.0
    %360 = vmatpush1.msra.mxu0 0.0
    %361 = vmatprep.subr.mxu0 0.0
    %362 = vmatpush1.msra.mxu0 0.0
    %363 = vmatprep.subr.mxu0 0.0
    %364 = vmatpush1.msra.mxu0 0.0
    %365 = vmatprep.subr.mxu0 0.0
    %366 = vmatpush1.msra.mxu0 0.0
    %367 = vmatprep.subr.mxu0 0.0
    %368 = vmatpush1.msra.mxu0 0.0
    %369 = vmatprep.subr.mxu0 0.0
    %370 = vmatpush1.msra.mxu0 0.0
    %371 = vmatprep.subr.mxu0 0.0
    %372 = vmatpush1.msra.mxu0 0.0
    %373 = vmatprep.subr.mxu0 0.0
    %374 = vmatpush1.msra.mxu0 0.0
    %375 = vmatprep.subr.mxu0 0.0
    %376 = vmatpush1.msra.mxu0 0.0
    %377 = vmatprep.subr.mxu0 0.0
    %378 = vmatpush1.msra.mxu0 0.0
    %379 = vmatprep.subr.mxu0 0.0
    %380 = vmatpush1.msra.mxu0 0.0
    %381 = vmatprep.subr.mxu0 0.0
    %382 = vmatpush1.msra.mxu0 0.0
    %383 = vmatprep.subr.mxu0 0.0
    %384 = vmatpush1.msra.mxu0 0.0
    %385 = vmatprep.subr.mxu0 0.0
    %386 = vmatpush1.msra.mxu0 0.0
    %387 = vmatprep.subr.mxu0 0.0
    %388 = vmatpush1.msra.mxu0 0.0
    %389 = vmatprep.subr.mxu0 0.0
    %390 = vmatpush1.msra.mxu0 0.0
    %391 = vmatprep.subr.mxu0 0.0
    %392 = vmatpush1.msra.mxu0 0.0
    %393 = vmatprep.subr.mxu0 0.0
    %394 = vmatpush1.msra.mxu0 0.0
    %395 = vmatprep.subr.mxu0 0.0
    %396 = vmatpush1.msra.mxu0 0.0
    %397 = vmatprep.subr.mxu0 0.0
    %398 = vmatpush1.msra.mxu0 0.0
    %399 = vmatprep.subr.mxu0 0.0
    %400 = vmatpush1.msra.mxu0 0.0
    %401 = vmatprep.subr.mxu0 0.0
    %402 = vmatpush1.msra.mxu0 0.0
    %403 = vmatprep.subr.mxu0 0.0
    %404 = vmatpush1.msra.mxu0 0.0
    %405 = vmatprep.mubr.f32.mxu0 0.0
    %406 = vmatmul.mubr.f32.gmra.mrb[0].mxu0 %v129
    %v407 = vpop.f32.mrb[0].mxu0
    %v408 = vadd.f32 %v338, %v407
    %v409 = vpop.f32.mrb[0].mxu0
    %410 = vdwg.mxu0
    %vm411 = vcmask 80896
    %412 = vst.msk [vmem:[#allocation2] sm:$0xff] %vm411, %v408
    // Predicated region
    $region14: #{tpu_custom_call.1} parent=1 // pred_check
      _
    $region15: #{tpu_custom_call.1} parent=1 // pred_check_branch
      %414 = sbr.rel (0) target = $region17
    $region16: #{tpu_custom_call.1} parent=1 // pred_region
      %s416 = ssub.s32 128, 128
      %417 = vsyncadd [#allocation3], %s416
      %s419 = sshll.u32 [#allocation2], 4
      %s420 = int_to_ptr.vmem [resolvable:$true] %s419
      %422 = dma.vmem_to_hbm [thread:$0]  %s420, 128, %s3, [#allocation3]
    $region17: #{tpu_custom_call.1} parent=1 // pred_fallthru
      _
    // Predicated region
    $region18: #{tpu_custom_call.1} parent=1 // pred_check
      _
    $region19: #{tpu_custom_call.1} parent=1 // pred_check_branch
      %424 = sbr.rel (0) target = $region21
    $region20: #{tpu_custom_call.1} parent=1 // pred_region
      %425 = dma.done [#allocation3], 128
    $region21: #{tpu_custom_call.1} parent=1 // pred_fallthru
      _
    %426 = vsyncpa [#allocation3], 1

</llo_original>
